<compile_context>
chip_gen: v7x
topology: tpu7x:2x2x1
jax: 0.10.0
libtpu: 0.0.40
codegen_flags: <defaults>
</compile_context>

<pallas_src>
import functools
import math

import jax
import jax.numpy as jnp
from jax.experimental import pallas as pl
from jax.experimental.pallas import tpu as pltpu

_LANES = 128
_SUBLANES = 8


def _cdiv(a: int, b: int) -> int:
    return -(-a // b)


def _round_up(a: int, b: int) -> int:
    return _cdiv(a, b) * b


def _rmse_partial_kernel(yhat_ref, y_ref, out_ref, acc_ref, *,
                         block_rows: int, tiles_per_split: int, n: int):
    s = pl.program_id(0)          # split (parallel axis; sharded across TCs on v7x)
    t = pl.program_id(1)          # tile within split (reduction axis)

    # Init this split's per-(sublane,lane) accumulator on its first tile.
    @pl.when(t == 0)
    def _():
        acc_ref[...] = jnp.zeros_like(acc_ref)

    # Nominal global row / flat-element offset of this tile (n is a static Python int).
    row0 = (s * tiles_per_split + t) * block_rows
    base = row0 * _LANES
    block_elems = block_rows * _LANES

    # Upcast to f32 in-kernel (inputs may be bf16); accumulate in f32.
    d = yhat_ref[...].astype(jnp.float32) - y_ref[...].astype(jnp.float32)

    def accumulate(d2):
        # (block_rows, 128) -> (block_rows//8, 8, 128): layout-preserving reshape,
        # sum over axis 0 is pure vreg adds (no per-tile cross-sublane XLU reduce).
        acc_ref[...] += jnp.sum(d2.reshape(-1, _SUBLANES, _LANES), axis=0)

    # Fast path: tile lies entirely within the valid n elements.
    @pl.when(base + block_elems <= n)
    def _():
        accumulate(d * d)

    # Boundary / overhang path: mask out elements past n (covers tail padding,
    # partial Pallas blocks and any clamped overhang tile).
    @pl.when(base + block_elems > n)
    def _():
        rr = jax.lax.broadcasted_iota(jnp.int32, (block_rows, _LANES), 0)
        cc = jax.lax.broadcasted_iota(jnp.int32, (block_rows, _LANES), 1)
        flat = base + rr * _LANES + cc
        dm = jnp.where(flat < n, d, 0.0)
        accumulate(dm * dm)

    # Finalize: write this split's (8, 128) partial sum; the scalar combine
    # (cross-lane reduce, /n, +eps, sqrt) happens in the JAX wrapper.
    @pl.when(t == tiles_per_split - 1)
    def _():
        out_ref[...] = acc_ref[...][None]


def rmse_loss(yhat, y, eps: float = 1e-6, max_block_rows: int = 4096):
    """RMSE loss: sqrt(mean((yhat - y)^2) + eps). yhat and y must have the same shape."""
    yhat = jnp.asarray(yhat)
    y = jnp.asarray(y)
    if yhat.shape != y.shape:
        raise ValueError(f"shape mismatch: {yhat.shape} vs {y.shape}")
    n = math.prod(yhat.shape) if yhat.shape else 1
    if n == 0:
        raise ValueError("rmse_loss: empty input")
    if not jnp.issubdtype(yhat.dtype, jnp.floating):
        yhat = yhat.astype(jnp.float32)
    if not jnp.issubdtype(y.dtype, jnp.floating):
        y = y.astype(jnp.float32)

    # Lane-dense (rows, 128) layout. Only pad the tail up to a whole 8x128 vreg;
    # if n is already a multiple of 1024 this is a free reshape (no copy).
    rows = _cdiv(n, _LANES)
    rows_p = _round_up(rows, _SUBLANES)
    padded_n = rows_p * _LANES

    def to2d(a):
        a = a.reshape(-1)
        if padded_n != n:
            a = jnp.pad(a, (0, padded_n - n))
        return a.reshape(rows_p, _LANES)

    yhat2, y2 = to2d(yhat), to2d(y)

    block_rows = min(_round_up(max(max_block_rows, _SUBLANES), _SUBLANES), rows_p)
    tiles_total = _cdiv(rows_p, block_rows)
    num_splits = 2 if tiles_total >= 2 else 1       # v7x: one split per TensorCore
    tiles_per_split = _cdiv(tiles_total, num_splits)

    kernel = functools.partial(
        _rmse_partial_kernel,
        block_rows=block_rows, tiles_per_split=tiles_per_split, n=n)

    # Clamp the block index so the (rare) overhang tile of an odd split stays in
    # bounds; its contribution is masked to zero inside the kernel anyway.
    def in_idx(s, t):
        return (jnp.minimum(s * tiles_per_split + t, tiles_total - 1), 0)

    out_bytes = num_splits * _SUBLANES * _LANES * 4
    partials = pl.pallas_call(
        kernel,
        out_shape=jax.ShapeDtypeStruct((num_splits, _SUBLANES, _LANES), jnp.float32),
        grid=(num_splits, tiles_per_split),
        in_specs=[
            pl.BlockSpec((block_rows, _LANES), in_idx),
            pl.BlockSpec((block_rows, _LANES), in_idx),
        ],
        out_specs=pl.BlockSpec((1, _SUBLANES, _LANES), lambda s, t: (s, 0, 0)),
        scratch_shapes=[pltpu.VMEM((_SUBLANES, _LANES), jnp.float32)],
        compiler_params=pltpu.CompilerParams(
            dimension_semantics=("parallel", "arbitrary"),
        ),
        cost_estimate=pl.CostEstimate(
            flops=3 * n,
            transcendentals=0,
            bytes_accessed=n * (yhat.dtype.itemsize + y.dtype.itemsize) + out_bytes,
        ),
    )(yhat2, y2)

    # Tiny trailing combine (num_splits * 1024 floats): mean, +eps, sqrt.
    return jnp.sqrt(jnp.sum(partials) * (1.0 / n) + eps)


def reference_rmse(yhat, y, eps: float = 1e-6):
    yhat = jnp.asarray(yhat, jnp.float32).reshape(-1)
    y = jnp.asarray(y, jnp.float32).reshape(-1)
    return jnp.sqrt(jnp.mean((yhat - y) ** 2) + eps)


if __name__ == "__main__":
    key = jax.random.PRNGKey(0)
    k1, k2 = jax.random.split(key)

    # Penguins-like regression shapes: (B, 1) predictions vs (B, 1) targets.
    # B = 333 is not a multiple of the tile -> exercises the masked ragged tail.
    batch = 333
    yhat = 4000.0 + 800.0 * jax.random.normal(k1, (batch, 1), dtype=jnp.float32)
    y = 4200.0 + 800.0 * jax.random.normal(k2, (batch, 1), dtype=jnp.float32)

    loss = jax.block_until_ready(rmse_loss(yhat, y))
    ref = reference_rmse(yhat, y)
    assert loss.shape == ()
    assert jnp.allclose(loss, ref, atol=1e-3, rtol=1e-5), (loss, ref)

    # Multi-tile / dual-split / boundary-tile path (small shapes, tiny block size).
    yh2 = jax.random.normal(k1, (17, 300), dtype=jnp.float32)
    y2 = jax.random.normal(k2, (17, 300), dtype=jnp.float32)
    l2 = jax.block_until_ready(rmse_loss(yh2, y2, max_block_rows=8))
    r2 = reference_rmse(yh2, y2)
    assert jnp.allclose(l2, r2, atol=1e-4, rtol=1e-5), (l2, r2)

    # Single-tile tiny batch path.
    l3 = jax.block_until_ready(rmse_loss(yhat[:8], y[:8]))
    assert jnp.allclose(l3, reference_rmse(yhat[:8], y[:8]), atol=1e-3, rtol=1e-5)

    print("KERNEL_OK")
</pallas_src>

<mosaic_0001>
module attributes {stable_mosaic.version = 11 : i64} {
  func.func @_rmse_partial_kernel(%arg0: i32, %arg1: i32, %arg2: memref<8x128xf32, #tpu.memory_space<vmem>>, %arg3: memref<8x128xf32, #tpu.memory_space<vmem>>, %arg4: memref<1x8x128xf32, #tpu.memory_space<vmem>>, %arg5: memref<8x128xf32, #tpu.memory_space<vmem>>) attributes {dimension_semantics = [#tpu.dimension_semantics<parallel>, #tpu.dimension_semantics<arbitrary>], iteration_bounds = array<i64: 1, 1>, scalar_prefetch = 0 : i64, scratch_operands = 1 : i64, tpu.core_type = #tpu.core_type<tc>, window_params = [{transform_indices = @transform_0, window_bounds = array<i64: 8, 128>}, {transform_indices = @transform_1, window_bounds = array<i64: 8, 128>}, {transform_indices = @transform_2, window_bounds = array<i64: 1, 8, 128>}]} {
    %c0_i32 = arith.constant 0 : i32
    %0 = arith.cmpi eq, %arg1, %c0_i32 : i32
    %1 = arith.extui %0 : i1 to i32
    %c0_i32_0 = arith.constant 0 : i32
    %2 = arith.cmpi ne, %1, %c0_i32_0 : i32
    scf.if %2 {
      %cst = arith.constant 0.000000e+00 : f32
      %21 = vector.broadcast %cst : f32 to vector<8x128xf32>
      %c0_10 = arith.constant 0 : index
      %c0_11 = arith.constant 0 : index
      %22 = vector.load %arg5[%c0_10, %c0_11] : memref<8x128xf32, #tpu.memory_space<vmem>>, vector<8x128xf32>
      tpu.vector_store %arg5[%c0_10, %c0_11], %21 {strides = array<i32>} : memref<8x128xf32, #tpu.memory_space<vmem>>, vector<8x128xf32>,
    } else {
    }
    %c1_i32 = arith.constant 1 : i32
    %3 = arith.muli %arg0, %c1_i32 : i32
    %4 = arith.addi %3, %arg1 : i32
    %c8_i32 = arith.constant 8 : i32
    %5 = arith.muli %4, %c8_i32 : i32
    %c128_i32 = arith.constant 128 : i32
    %6 = arith.muli %5, %c128_i32 : i32
    %c0 = arith.constant 0 : index
    %c0_1 = arith.constant 0 : index
    %7 = vector.load %arg2[%c0, %c0_1] : memref<8x128xf32, #tpu.memory_space<vmem>>, vector<8x128xf32>
    %c0_2 = arith.constant 0 : index
    %c0_3 = arith.constant 0 : index
    %8 = vector.load %arg3[%c0_2, %c0_3] : memref<8x128xf32, #tpu.memory_space<vmem>>, vector<8x128xf32>
    %9 = arith.subf %7, %8 : vector<8x128xf32>
    %c1024_i32 = arith.constant 1024 : i32
    %10 = arith.addi %6, %c1024_i32 : i32
    %c333_i32 = arith.constant 333 : i32
    %11 = arith.cmpi sle, %10, %c333_i32 : i32
    %12 = arith.extui %11 : i1 to i32
    %c0_i32_4 = arith.constant 0 : i32
    %13 = arith.cmpi ne, %12, %c0_i32_4 : i32
    scf.if %13 {
      %21 = arith.mulf %9, %9 : vector<8x128xf32>
      %c0_10 = arith.constant 0 : index
      %c0_11 = arith.constant 0 : index
      %22 = vector.load %arg5[%c0_10, %c0_11] : memref<8x128xf32, #tpu.memory_space<vmem>>, vector<8x128xf32>
      %23 = vector.shape_cast %21 : vector<8x128xf32> to vector<1x8x128xf32>
      %cst = arith.constant dense<0.000000e+00> : vector<8x128xf32>
      %24 = vector.multi_reduction <add>, %23, %cst [0] : vector<1x8x128xf32> to vector<8x128xf32>
      %25 = arith.addf %22, %24 : vector<8x128xf32>
      %c0_12 = arith.constant 0 : index
      %c0_13 = arith.constant 0 : index
      %26 = vector.load %arg5[%c0_12, %c0_13] : memref<8x128xf32, #tpu.memory_space<vmem>>, vector<8x128xf32>
      tpu.vector_store %arg5[%c0_12, %c0_13], %25 {strides = array<i32>} : memref<8x128xf32, #tpu.memory_space<vmem>>, vector<8x128xf32>,
    } else {
    }
    %c1024_i32_5 = arith.constant 1024 : i32
    %14 = arith.addi %6, %c1024_i32_5 : i32
    %c333_i32_6 = arith.constant 333 : i32
    %15 = arith.cmpi sgt, %14, %c333_i32_6 : i32
    %16 = arith.extui %15 : i1 to i32
    %c0_i32_7 = arith.constant 0 : i32
    %17 = arith.cmpi ne, %16, %c0_i32_7 : i32
    scf.if %17 {
      %21 = tpu.iota {dimensions = array<i32: 0>} : vector<8x128xi32>
      %22 = tpu.iota {dimensions = array<i32: 1>} : vector<8x128xi32>
      %c128_i32_10 = arith.constant 128 : i32
      %23 = vector.broadcast %c128_i32_10 : i32 to vector<8x128xi32>
      %24 = arith.muli %21, %23 : vector<8x128xi32>
      %25 = vector.broadcast %6 : i32 to vector<8x128xi32>
      %26 = arith.addi %25, %24 : vector<8x128xi32>
      %27 = arith.addi %26, %22 : vector<8x128xi32>
      %c333_i32_11 = arith.constant 333 : i32
      %28 = vector.broadcast %c333_i32_11 : i32 to vector<8x128xi32>
      %29 = arith.cmpi slt, %27, %28 : vector<8x128xi32>
      %cst = arith.constant 0.000000e+00 : f32
      %30 = vector.broadcast %cst : f32 to vector<8x128xf32>
      %31 = arith.select %29, %9, %30 : vector<8x128xi1>, vector<8x128xf32>
      %32 = arith.mulf %31, %31 : vector<8x128xf32>
      %c0_12 = arith.constant 0 : index
      %c0_13 = arith.constant 0 : index
      %33 = vector.load %arg5[%c0_12, %c0_13] : memref<8x128xf32, #tpu.memory_space<vmem>>, vector<8x128xf32>
      %34 = vector.shape_cast %32 : vector<8x128xf32> to vector<1x8x128xf32>
      %cst_14 = arith.constant dense<0.000000e+00> : vector<8x128xf32>
      %35 = vector.multi_reduction <add>, %34, %cst_14 [0] : vector<1x8x128xf32> to vector<8x128xf32>
      %36 = arith.addf %33, %35 : vector<8x128xf32>
      %c0_15 = arith.constant 0 : index
      %c0_16 = arith.constant 0 : index
      %37 = vector.load %arg5[%c0_15, %c0_16] : memref<8x128xf32, #tpu.memory_space<vmem>>, vector<8x128xf32>
      tpu.vector_store %arg5[%c0_15, %c0_16], %36 {strides = array<i32>} : memref<8x128xf32, #tpu.memory_space<vmem>>, vector<8x128xf32>,
    } else {
    }
    %c0_i32_8 = arith.constant 0 : i32
    %18 = arith.cmpi eq, %arg1, %c0_i32_8 : i32
    %19 = arith.extui %18 : i1 to i32
    %c0_i32_9 = arith.constant 0 : i32
    %20 = arith.cmpi ne, %19, %c0_i32_9 : i32
    scf.if %20 {
      %c0_10 = arith.constant 0 : index
      %c0_11 = arith.constant 0 : index
      %21 = vector.load %arg5[%c0_10, %c0_11] : memref<8x128xf32, #tpu.memory_space<vmem>>, vector<8x128xf32>
      %22 = vector.shape_cast %21 : vector<8x128xf32> to vector<1x8x128xf32>
      %c0_12 = arith.constant 0 : index
      %c0_13 = arith.constant 0 : index
      %c0_14 = arith.constant 0 : index
      %23 = vector.load %arg4[%c0_12, %c0_13, %c0_14] : memref<1x8x128xf32, #tpu.memory_space<vmem>>, vector<1x8x128xf32>
      tpu.vector_store %arg4[%c0_12, %c0_13, %c0_14], %22 {strides = array<i32>} : memref<1x8x128xf32, #tpu.memory_space<vmem>>, vector<1x8x128xf32>,
    } else {
    }
    return
  }
  func.func @transform_0(%arg0: i32, %arg1: i32) -> (i32, i32) {
    %c1_i32 = arith.constant 1 : i32
    %0 = arith.muli %arg0, %c1_i32 : i32
    %1 = arith.addi %0, %arg1 : i32
    %c0_i32 = arith.constant 0 : i32
    %2 = arith.minsi %1, %c0_i32 : i32
    %c0_i32_0 = arith.constant 0 : i32
    %c0_i32_1 = arith.constant 0 : i32
    return %2, %c0_i32_0 : i32, i32
  }
  func.func @transform_1(%arg0: i32, %arg1: i32) -> (i32, i32) {
    %c1_i32 = arith.constant 1 : i32
    %0 = arith.muli %arg0, %c1_i32 : i32
    %1 = arith.addi %0, %arg1 : i32
    %c0_i32 = arith.constant 0 : i32
    %2 = arith.minsi %1, %c0_i32 : i32
    %c0_i32_0 = arith.constant 0 : i32
    %c0_i32_1 = arith.constant 0 : i32
    return %2, %c0_i32_0 : i32, i32
  }
  func.func @transform_2(%arg0: i32, %arg1: i32) -> (i32, i32, i32) {
    %c0_i32 = arith.constant 0 : i32
    %c0_i32_0 = arith.constant 0 : i32
    %c0_i32_1 = arith.constant 0 : i32
    return %arg0, %c0_i32, %c0_i32_0 : i32, i32, i32
  }
}

</mosaic_0001>

<llo_original>
// kernel: tpu_custom_call.1
$region0: #{tpu_custom_call.1}
  #allocation0 [shape = 'u32[]', space=smem, size = 0x4, offset = 0x4, fixed_abs, tag = 'smem constant byte address 0x4 - core index']
  #allocation1 [shape = 'u32[144,128]{1,0:T(1,128)}', space=vmem, size = 0x12000, scoped, tag = 'internal scratch']
  #allocation2 [shape = 'f32[8,128]{1,0:T(8,128)}', space=vmem, size = 0x1000, scoped, tag = 'scratch operand']
  %s0 = inlined_call_operand.hbm [shape: f32[8,128], index: 0, kind: input, shape index: {}]
  %s1 = inlined_call_operand.hbm [shape: f32[8,128], index: 1, kind: input, shape index: {}]
  %s2 = inlined_call_operand.hbm [shape: f32[1,8,128], index: 2, kind: output, shape index: {}]
  %s3 = sld [smem:[#allocation0]]
  $region42: #{tpu_custom_call.1} parent=0
    _
  %s5 = ssub.s32 1, %s3
  %s6 = scalar_select 0, %s5, %s3
  $region1: #{tpu_custom_call.1} parent=0
    #allocation3 [shape = 'u8[4096]{0}', space=vmem, size = 0x1000, scoped, tag = 'input window, operand 0, single buffered']
    #allocation4 [shape = 's32[1]{0}', space=sflag, size = 0x4, scoped, tag = 'scoped memory for tpu_custom_call.1']
    #allocation5 [shape = 's32[1]{0}', space=sflag, size = 0x4, scoped, tag = 'scoped memory for tpu_custom_call.1']
    #allocation6 [shape = 'u8[4096]{0}', space=vmem, size = 0x1000, scoped, tag = 'input window, operand 1, single buffered']
    #allocation7 [shape = 's32[1]{0}', space=sflag, size = 0x4, scoped, tag = 'scoped memory for tpu_custom_call.1']
    #allocation8 [shape = 'u8[4096]{0}', space=vmem, size = 0x1000, scoped, tag = 'output window, operand 0, single buffered']
    %7 = vsyncpa [#allocation4], 0
    %8 = vsyncpa [#allocation7], 0
    %9 = vsyncpa [#allocation5], 0
    // Predicated region
    $region2: #{tpu_custom_call.1} parent=1 // pred_check
      _
    $region3: #{tpu_custom_call.1} parent=1 // pred_check_branch
      %11 = sbr.rel (0) target = $region5
    $region4: #{tpu_custom_call.1} parent=1 // pred_region
      %s12 = sadd.s32 0, 0
      %p13 = scmp.lt.s32.totalorder %s12, 0
      %s14 = scalar_select %p13, %s12, 0
      %s16 = ssub.s32 128, 128
      %17 = vsyncadd [#allocation4], %s16
      %s18 = smul.addr %s14, 128
      %s19 = scalar_lea.hbm %s0, %s18
      %s21 = sshll.u32 [#allocation3], 4
      %s22 = int_to_ptr.vmem [resolvable:$true] %s21
      %24 = dma.hbm_to_vmem [thread:$0]  %s19, 128, %s22, [#allocation4]
    $region5: #{tpu_custom_call.1} parent=1 // pred_fallthru
      _
    // Predicated region
    $region6: #{tpu_custom_call.1} parent=1 // pred_check
      _
    $region7: #{tpu_custom_call.1} parent=1 // pred_check_branch
      %26 = sbr.rel (0) target = $region9
    $region8: #{tpu_custom_call.1} parent=1 // pred_region
      %s27 = sadd.s32 0, 0
      %p28 = scmp.lt.s32.totalorder %s27, 0
      %s29 = scalar_select %p28, %s27, 0
      %s31 = ssub.s32 128, 128
      %32 = vsyncadd [#allocation7], %s31
      %s33 = smul.addr %s29, 128
      %s34 = scalar_lea.hbm %s1, %s33
      %s36 = sshll.u32 [#allocation6], 4
      %s37 = int_to_ptr.vmem [resolvable:$true] %s36
      %39 = dma.hbm_to_vmem [thread:$0]  %s34, 128, %s37, [#allocation7]
    $region9: #{tpu_custom_call.1} parent=1 // pred_fallthru
      _
    // Predicated region
    $region10: #{tpu_custom_call.1} parent=1 // pred_check
      _
    $region11: #{tpu_custom_call.1} parent=1 // pred_check_branch
      %41 = sbr.rel (0) target = $region13
    $region12: #{tpu_custom_call.1} parent=1 // pred_region
      %42 = dma.done [#allocation4], 128
    $region13: #{tpu_custom_call.1} parent=1 // pred_fallthru
      _
    // Predicated region
    $region14: #{tpu_custom_call.1} parent=1 // pred_check
      _
    $region15: #{tpu_custom_call.1} parent=1 // pred_check_branch
      %44 = sbr.rel (0) target = $region17
    $region16: #{tpu_custom_call.1} parent=1 // pred_region
      %45 = dma.done [#allocation7], 128
    $region17: #{tpu_custom_call.1} parent=1 // pred_fallthru
      _
    %s46 = sadd.s32 0, 0
    %p47 = scmp.lt.s32.totalorder %s46, 0
    %s48 = scalar_select %p47, %s46, 0
    %s49 = sadd.s32 0, 0
    %p50 = scmp.lt.s32.totalorder %s49, 0
    %s51 = scalar_select %p50, %s49, 0
    %p52 = scmp.eq.s32.totalorder 0, 0
    // Predicated region
    $region18: #{tpu_custom_call.1} parent=1 // pred_check
      %p53 = pneg %p52
    $region19: #{tpu_custom_call.1} parent=1 // pred_check_branch
      %55 = sbr.rel (%p53) target = $region21
    $region20: #{tpu_custom_call.1} parent=1 // pred_region
      %56 = vst [vmem:[#allocation2] sm:$0xff] 0.0
    $region21: #{tpu_custom_call.1} parent=1 // pred_fallthru
      _
    %s57 = sadd.s32 0, 0
    %s58 = smul.u32 %s57, 1024
    %v59 = vld [vmem:[#allocation3] sm:$0xff]
    %v60 = vld [vmem:[#allocation6] sm:$0xff]
    %v61 = vsub.f32 %v59, %v60
    %s62 = sadd.s32 %s58, 1024
    %p63 = scmp.le.s32.totalorder %s62, 333
    // Predicated region
    $region22: #{tpu_custom_call.1} parent=1 // pred_check
      %p64 = pneg %p63
    $region23: #{tpu_custom_call.1} parent=1 // pred_check_branch
      %66 = sbr.rel (%p64) target = $region25
    $region24: #{tpu_custom_call.1} parent=1 // pred_region
      %v67 = vmul.f32 %v61, %v61
      %v68 = vld [vmem:[#allocation2] sm:$0xff]
      %v69 = vadd.f32 %v67, 0.0
      %v70 = vadd.f32 %v68, %v69
      %71 = vst [vmem:[#allocation2] sm:$0xff] %v70
    $region25: #{tpu_custom_call.1} parent=1 // pred_fallthru
      _
    %p72 = scmp.gt.s32.totalorder %s62, 333
    // Predicated region
    $region26: #{tpu_custom_call.1} parent=1 // pred_check
      %p73 = pneg %p72
    $region27: #{tpu_custom_call.1} parent=1 // pred_check_branch
      %75 = sbr.rel (%p73) target = $region29
    $region28: #{tpu_custom_call.1} parent=1 // pred_region
      %v76 = vlaneseq
      %v77 = vshrl.u32 %v76, 7
      %v78 = vlaneseq
      %v79 = vand.u32 %v78, 127
      %v80 = vmul.u32 %v77, 128
      %v81 = vstv %s58
      %v82 = vadd.s32 %v81, %v80
      %v83 = vadd.s32 %v82, %v79
      %vm84 = vcmp.lt.s32.totalorder %v83, 333
      %v85 = vsel %vm84, %v61, 0.0
      %v86 = vmul.f32 %v85, %v85
      %v87 = vld [vmem:[#allocation2] sm:$0xff]
      %v88 = vadd.f32 %v86, 0.0
      %v89 = vadd.f32 %v87, %v88
      %90 = vst [vmem:[#allocation2] sm:$0xff] %v89
    $region29: #{tpu_custom_call.1} parent=1 // pred_fallthru
      _
    // Predicated region
    $region30: #{tpu_custom_call.1} parent=1 // pred_check
      %p91 = pneg %p52
    $region31: #{tpu_custom_call.1} parent=1 // pred_check_branch
      %93 = sbr.rel (%p91) target = $region33
    $region32: #{tpu_custom_call.1} parent=1 // pred_region
      %v94 = vld [vmem:[#allocation2] sm:$0xff]
      %95 = vst [vmem:[#allocation8] sm:$0xff] %v94
    $region33: #{tpu_custom_call.1} parent=1 // pred_fallthru
      _
    // Predicated region
    $region34: #{tpu_custom_call.1} parent=1 // pred_check
      _
    $region35: #{tpu_custom_call.1} parent=1 // pred_check_branch
      %97 = sbr.rel (0) target = $region37
    $region36: #{tpu_custom_call.1} parent=1 // pred_region
      %s99 = ssub.s32 128, 128
      %100 = vsyncadd [#allocation5], %s99
      %s102 = sshll.u32 [#allocation8], 4
      %s103 = int_to_ptr.vmem [resolvable:$true] %s102
      %105 = dma.vmem_to_hbm [thread:$0]  %s103, 128, %s2, [#allocation5]
    $region37: #{tpu_custom_call.1} parent=1 // pred_fallthru
      _
    // Predicated region
    $region38: #{tpu_custom_call.1} parent=1 // pred_check
      _
    $region39: #{tpu_custom_call.1} parent=1 // pred_check_branch
      %107 = sbr.rel (0) target = $region41
    $region40: #{tpu_custom_call.1} parent=1 // pred_region
      %108 = dma.done [#allocation5], 128
    $region41: #{tpu_custom_call.1} parent=1 // pred_fallthru
      _
    %109 = vsyncpa [#allocation4], 1
    %110 = vsyncpa [#allocation7], 1
    %111 = vsyncpa [#allocation5], 1

</llo_original>
